<compile_context>
chip_gen: v5e
topology: v5e:2x2
jax: 0.10.0
libtpu: 0.0.40
codegen_flags: <defaults>
</compile_context>

<pallas_src>
import jax
import jax.numpy as jnp
from jax.experimental import pallas as pl
from jax.experimental.pallas import tpu as pltpu


MASKING = (10, 30)
MASKING_LOW = float(MASKING[0]) / 255.0    # cast to f32 at compare time
MASKING_HIGH = float(MASKING[1]) / 255.0

_LANES = 128
_TARGET_BLOCK_BYTES = 4 * 1024 * 1024      # per-buffer tile budget (all dtypes)
_MIN_BLOCK_BYTES = 512 * 1024              # never shrink tiles below this when splitting
_TARGET_GRID_STEPS = 4                     # >= 2 x TensorCores on v7x for megacore split
_VMEM_LIMIT_BYTES = 48 * 1024 * 1024       # 4 buffers x 4 MiB + headroom; < 64 MiB (v7x phys)


def _masking_kernel(x_ref, o_ref):
    x = x_ref[...]
    xf = x.astype(jnp.float32)
    keep = (xf < jnp.float32(MASKING_LOW)) | (xf > jnp.float32(MASKING_HIGH))
    o_ref[...] = jnp.where(keep, x, 0)


def _masking_2d(x2d):
    """Run the kernel on a lane-dense (rows, 128) slab."""
    rows, lanes = x2d.shape
    itemsize = jnp.dtype(x2d.dtype).itemsize
    bytes_per_row = lanes * itemsize

    # Byte-budgeted tile height (multiple of 32 sublanes for packed sub-32-bit dtypes).
    budget_rows = max(32, (_TARGET_BLOCK_BYTES // bytes_per_row) // 32 * 32)
    min_rows = max(32, (_MIN_BLOCK_BYTES // bytes_per_row) // 32 * 32)

    # Aim for >= _TARGET_GRID_STEPS steps on large tensors (dual-TC v7x), but never
    # split mid-size tensors below the byte floor (single-TC v5e/v6e).
    split_rows = ((pl.cdiv(rows, _TARGET_GRID_STEPS) + 31) // 32) * 32
    block_rows = min(budget_rows, max(min_rows, split_rows))
    if block_rows >= rows:
        block_rows = rows          # full-extent block: always layout-legal
    grid = (pl.cdiv(rows, block_rows),)   # ragged last block is masked by Pallas

    return pl.pallas_call(
        _masking_kernel,
        out_shape=jax.ShapeDtypeStruct((rows, lanes), x2d.dtype),
        grid=grid,
        in_specs=[pl.BlockSpec((block_rows, lanes), lambda i: (i, 0))],
        out_specs=pl.BlockSpec((block_rows, lanes), lambda i: (i, 0)),
        input_output_aliases={0: 0},
        compiler_params=pltpu.CompilerParams(
            dimension_semantics=("parallel",),
            vmem_limit_bytes=_VMEM_LIMIT_BYTES,
        ),
    )(x2d)


def _masking_tail(x_flat_tail, dtype):
    """Plain-JAX path for a <=127-element tail (no padded full-array copies)."""
    xf = x_flat_tail.astype(jnp.float32)
    keep = (xf < jnp.float32(MASKING_LOW)) | (xf > jnp.float32(MASKING_HIGH))
    return jnp.where(keep, x_flat_tail, 0).astype(dtype)


def masking_layer(x):
    """Elementwise masking. x: any shape / float dtype (NCHW expected)."""
    orig_shape = x.shape
    dtype = x.dtype
    n_elems = x.size
    if n_elems == 0:
        return x

    x_flat = jnp.reshape(x, (-1,))
    bulk_n = (n_elems // _LANES) * _LANES

    if bulk_n == n_elems:
        # Common case (images): element count is a lane multiple -> zero-copy wrapper.
        out2d = _masking_2d(jnp.reshape(x_flat, (bulk_n // _LANES, _LANES)))
        return jnp.reshape(out2d, orig_shape)

    # Non-lane-multiple: kernel on the bulk, jnp.where on the tiny tail.
    parts = []
    if bulk_n:
        bulk2d = jnp.reshape(x_flat[:bulk_n], (bulk_n // _LANES, _LANES))
        parts.append(jnp.reshape(_masking_2d(bulk2d), (-1,)))
    parts.append(_masking_tail(x_flat[bulk_n:], dtype))
    return jnp.reshape(jnp.concatenate(parts), orig_shape)


def _reference(x):
    return jnp.where((x < MASKING_LOW) | (MASKING_HIGH < x), x, jnp.zeros_like(x))


if __name__ == "__main__":
    key = jax.random.PRNGKey(0)

    # Small NCHW input, values roughly in [0, 1] like a ToTensor'd image.
    x = jax.random.uniform(key, (2, 4, 16, 16), dtype=jnp.float32)
    out = jax.block_until_ready(masking_layer(x))
    ref = _reference(x)
    assert out.shape == x.shape and out.dtype == x.dtype
    assert bool(jnp.all(out == ref))

    # Non-128-multiple element count exercises the bulk + tail path.
    x_odd = jax.random.uniform(jax.random.PRNGKey(1), (5, 7, 33), dtype=jnp.float32)
    out_odd = jax.block_until_ready(masking_layer(x_odd))
    assert bool(jnp.all(out_odd == _reference(x_odd)))

    print("KERNEL_OK")
</pallas_src>

<mosaic_0001>
module attributes {stable_mosaic.version = 11 : i64} {
  func.func @_masking_kernel(%arg0: i32, %arg1: memref<16x128xf32, #tpu.memory_space<vmem>>, %arg2: memref<16x128xf32, #tpu.memory_space<vmem>>) attributes {dimension_semantics = [#tpu.dimension_semantics<parallel>], iteration_bounds = array<i64: 1>, scalar_prefetch = 0 : i64, scratch_operands = 0 : i64, tpu.core_type = #tpu.core_type<tc>, window_params = [{transform_indices = @transform_0, window_bounds = array<i64: 16, 128>}, {transform_indices = @transform_1, window_bounds = array<i64: 16, 128>}]} {
    %c0 = arith.constant 0 : index
    %c0_0 = arith.constant 0 : index
    %0 = vector.load %arg1[%c0, %c0_0] : memref<16x128xf32, #tpu.memory_space<vmem>>, vector<16x128xf32>
    %cst = arith.constant 0.0392156877 : f32
    %1 = vector.broadcast %cst : f32 to vector<16x128xf32>
    %2 = arith.cmpf olt, %0, %1 : vector<16x128xf32>
    %cst_1 = arith.constant 0.117647059 : f32
    %3 = vector.broadcast %cst_1 : f32 to vector<16x128xf32>
    %4 = arith.cmpf ogt, %0, %3 : vector<16x128xf32>
    %5 = arith.ori %2, %4 : vector<16x128xi1>
    %c0_i32 = arith.constant 0 : i32
    %6 = arith.sitofp %c0_i32 : i32 to f32
    %7 = vector.broadcast %6 : f32 to vector<16x128xf32>
    %8 = arith.select %5, %0, %7 : vector<16x128xi1>, vector<16x128xf32>
    %c0_2 = arith.constant 0 : index
    %c0_3 = arith.constant 0 : index
    %9 = vector.load %arg2[%c0_2, %c0_3] : memref<16x128xf32, #tpu.memory_space<vmem>>, vector<16x128xf32>
    tpu.vector_store %arg2[%c0_2, %c0_3], %8 {strides = array<i32>} : memref<16x128xf32, #tpu.memory_space<vmem>>, vector<16x128xf32>,
    return
  }
  func.func @transform_0(%arg0: i32) -> (i32, i32) {
    %c0_i32 = arith.constant 0 : i32
    %c0_i32_0 = arith.constant 0 : i32
    return %arg0, %c0_i32 : i32, i32
  }
  func.func @transform_1(%arg0: i32) -> (i32, i32) {
    %c0_i32 = arith.constant 0 : i32
    %c0_i32_0 = arith.constant 0 : i32
    return %arg0, %c0_i32 : i32, i32
  }
}

</mosaic_0001>

<llo_original>
// kernel: tpu_custom_call.1
$region0: #{tpu_custom_call.1}
  #allocation0 [shape = 'u32[]', space=smem, size = 0x4, offset = 0x4, fixed_abs, tag = 'smem constant byte address 0x4 - core index']
  #allocation1 [shape = 'u32[72,128]{1,0:T(1,128)}', space=vmem, size = 0x9000, scoped, tag = 'internal scratch']
  %s0 = inlined_call_operand.hbm [shape: f32[16,128], index: 0, kind: input, shape index: {}, may-alias: {0,1}]
  %s1 = inlined_call_operand.hbm [shape: f32[16,128], index: 1, kind: output, shape index: {}, may-alias: {0,1}]
  %s2 = sld [smem:[#allocation0]]
  $region18: #{tpu_custom_call.1} parent=0
    _
  %s4 = ssub.s32 1, %s2
  %s5 = scalar_select 0, %s4, %s2
  $region1: #{tpu_custom_call.1} parent=0
    #allocation2 [shape = 'u8[8192]{0}', space=vmem, size = 0x2000, scoped, tag = 'input window, operand 0, single buffered']
    #allocation3 [shape = 's32[1]{0}', space=sflag, size = 0x4, scoped, tag = 'scoped memory for tpu_custom_call.1']
    #allocation4 [shape = 's32[1]{0}', space=sflag, size = 0x4, scoped, tag = 'scoped memory for tpu_custom_call.1']
    #allocation5 [shape = 'u8[8192]{0}', space=vmem, size = 0x2000, scoped, tag = 'output window, operand 0, single buffered']
    %6 = vsyncpa [#allocation3], 0
    %7 = vsyncpa [#allocation4], 0
    // Predicated region
    $region2: #{tpu_custom_call.1} parent=1 // pred_check
      _
    $region3: #{tpu_custom_call.1} parent=1 // pred_check_branch
      %9 = sbr.rel (0) target = $region5
    $region4: #{tpu_custom_call.1} parent=1 // pred_region
      %11 = vsyncadd [#allocation3], 0
      %s12 = sshll.u32 %s0, 4
      %s13 = int_to_ptr.hbm [resolvable:$true] %s12
      %s14 = sshll.u32 [#allocation2], 4
      %s15 = int_to_ptr.vmem [resolvable:$true] %s14
      %20 = dma.hbm_to_vmem [thread:$0]  %s13, 256, %s15, [#allocation3], 128, 128, 8
    $region5: #{tpu_custom_call.1} parent=1 // pred_fallthru
      _
    // Predicated region
    $region6: #{tpu_custom_call.1} parent=1 // pred_check
      _
    $region7: #{tpu_custom_call.1} parent=1 // pred_check_branch
      %22 = sbr.rel (0) target = $region9
    $region8: #{tpu_custom_call.1} parent=1 // pred_region
      %24 = dma.done [#allocation3], 256
    $region9: #{tpu_custom_call.1} parent=1 // pred_fallthru
      _
    %v25 = vld [vmem:[#allocation2] sm:$0xff]
    %v26 = vld [vmem:[#allocation2 + $0x8] sm:$0xff]
    %vm27 = vcmp.lt.f32.partialorder %v25, 0.039215688
    %vm28 = vcmp.lt.f32.partialorder %v26, 0.039215688
    %vm29 = vcmp.gt.f32.partialorder %v25, 0.11764706
    %vm30 = vcmp.gt.f32.partialorder %v26, 0.11764706
    %vm31 = vmor %vm27, %vm29
    %vm32 = vmor %vm28, %vm30
    %v33 = vsel %vm31, %v25, 0.0
    %v34 = vsel %vm32, %v26, 0.0
    %35 = vst [vmem:[#allocation5] sm:$0xff] %v33
    %36 = vst [vmem:[#allocation5 + $0x8] sm:$0xff] %v34
    // Predicated region
    $region10: #{tpu_custom_call.1} parent=1 // pred_check
      _
    $region11: #{tpu_custom_call.1} parent=1 // pred_check_branch
      %38 = sbr.rel (0) target = $region13
    $region12: #{tpu_custom_call.1} parent=1 // pred_region
      %40 = vsyncadd [#allocation4], 0
      %s41 = sshll.u32 [#allocation5], 4
      %s42 = int_to_ptr.vmem [resolvable:$true] %s41
      %s43 = sshll.u32 %s1, 4
      %s44 = int_to_ptr.hbm [resolvable:$true] %s43
      %49 = dma.vmem_to_hbm [thread:$0]  %s42, 256, %s44, [#allocation4], 128, 128, 8
    $region13: #{tpu_custom_call.1} parent=1 // pred_fallthru
      _
    // Predicated region
    $region14: #{tpu_custom_call.1} parent=1 // pred_check
      _
    $region15: #{tpu_custom_call.1} parent=1 // pred_check_branch
      %51 = sbr.rel (0) target = $region17
    $region16: #{tpu_custom_call.1} parent=1 // pred_region
      %53 = dma.done [#allocation4], 256
    $region17: #{tpu_custom_call.1} parent=1 // pred_fallthru
      _
    %54 = vsyncpa [#allocation3], 1
    %55 = vsyncpa [#allocation4], 1

</llo_original>
